<compile_context>
chip_gen: v5e
topology: v5e:2x2
jax: 0.10.0
libtpu: 0.0.40
codegen_flags: <defaults>
</compile_context>

<pallas_src>
import functools

import jax
import jax.numpy as jnp
from jax.experimental import pallas as pl
from jax.experimental.pallas import tpu as pltpu

SCALE = 10  # module default: SRPUpsampleBlock(scale=10)


def _round_up(a, b):
    return (a + b - 1) // b * b


def _srp_shuffle_relu_kernel(x_ref, p_ref, o_ref, *, scale, n_split):
    """x_ref: (TN, scale, TL) or (TN, scale*TL)  input tile (rows = fused b*out_c)
       p_ref: (n_split*scale*TL, scale*TL)       one-hot interleave matrix (bf16)
       o_ref: (TN, scale*TL)                     lane-dense output tile

    out[n, l*scale + s] = relu(x[n, s, l]) computed as relu(X @ P) with
    P[s*TL + l, l*scale + s] = 1; for f32 inputs X is the exact 3-term bf16
    split concatenated along K (single MXU-accumulated dot, no f32 add chain)."""
    if len(x_ref.shape) == 3:
        # (TN, scale, TL) -> (TN, K) with K ordered (s-major, l-minor); P is
        # built with the matching K order, so this is just lane placement.
        xf = jnp.concatenate([x_ref[:, s, :] for s in range(scale)], axis=-1)
    else:
        xf = x_ref[...]  # already (TN, K), pre-flattened outside (free)

    if n_split == 1:
        xk = xf.astype(jnp.bfloat16)  # bf16 inputs: single exact MXU pass
    else:
        # Exact 3-term bf16 split of f32: x = h1 + h2 + h3 exactly, and the
        # one-hot P copies each term, so the f32-accumulated dot is bit-exact.
        xf = xf.astype(jnp.float32)
        h1 = xf.astype(jnp.bfloat16)
        r1 = xf - h1.astype(jnp.float32)
        h2 = r1.astype(jnp.bfloat16)
        r2 = r1 - h2.astype(jnp.float32)
        h3 = r2.astype(jnp.bfloat16)
        xk = jnp.concatenate([h1, h2, h3], axis=-1)  # (TN, n_split*K) bf16

    acc = jnp.dot(xk, p_ref[...], preferred_element_type=jnp.float32)
    o_ref[...] = jnp.maximum(acc, 0.0).astype(o_ref.dtype)


def _one_hot_interleave(scale, tl, n_split, dtype=jnp.bfloat16):
    """P[k, c] = 1 iff k = s*tl + l and c = l*scale + s; tiled n_split times on K."""
    K = scale * tl
    k = jnp.arange(K)
    c = jnp.arange(K)
    p = ((k[:, None] // tl == c[None, :] % scale)
         & (k[:, None] % tl == c[None, :] // scale)).astype(dtype)
    if n_split > 1:
        p = jnp.concatenate([p] * n_split, axis=0)
    return p


def srp_upsample_block(x, scale=SCALE):
    """x: (B, C, L). Returns relu(SRPShuffle(scale)(x)) of shape (B, C//scale, L*scale)."""
    B, C, L = x.shape
    if C % scale != 0:
        raise Exception("Check input channels")
    out_C = C // scale
    out_L = scale * L
    N = B * out_C
    itemsize = jnp.dtype(x.dtype).itemsize

    # f32 -> exact 3-term bf16 split; bf16 -> single pass (already exact).
    n_split = 1 if x.dtype == jnp.bfloat16 else 3

    # ---- length (lane) tiling: last block dim 128-aligned or full extent ----
    if L <= 128:
        TL, L_pad, flat = L, L, True  # single l-tile; pass x pre-flattened 2D
    else:
        TL = 128
        L_pad = _round_up(L, TL)
        flat = False
        # TODO(synk): when L % 128 != 0 the jnp.pad below is one extra HBM pass;
        # a masked ragged-edge tile (pl.BoundedSlice) would avoid it.

    # ---- row tiling: pad N to a multiple of 8; large N gets 256/128-row tiles
    N8 = _round_up(N, 8)
    if N8 >= 256 and N8 % 256 == 0:
        TN, N_pad = 256, N8
    elif N8 >= 128:
        TN, N_pad = 128, _round_up(N8, 128)
    else:
        TN, N_pad = N8, N8  # tiny problems: one row tile, no large zero-pad

    K = scale * TL          # contraction length per split term
    CH = K                  # lane-dense output chunk per l-tile
    K3 = n_split * K

    x3 = x.reshape(N, scale, L)  # contiguous (free) view: row n = (b, oc)
    if N_pad != N or L_pad != L:
        x3 = jnp.pad(x3, ((0, N_pad - N), (0, 0), (0, L_pad - L)))

    if flat:
        x_in = x3.reshape(N_pad, K)  # free contiguous minor-dim collapse
        in_spec = pl.BlockSpec((TN, K), lambda r, t: (r, 0))
    else:
        x_in = x3
        in_spec = pl.BlockSpec((TN, scale, TL), lambda r, t: (r, 0, t))

    p3 = _one_hot_interleave(scale, TL, n_split)  # (K3, CH) bf16, resident

    grid = (N_pad // TN, L_pad // TL)

    # ---- right-sized VMEM budget (double-buffered in/out/P + split temps) ----
    in_tile = TN * K * itemsize
    out_tile = TN * CH * itemsize
    p_bytes = K3 * CH * 2
    tmp = TN * K3 * 2 + (TN * K * 4 * 3 if n_split > 1 else 0)
    vmem = int((2 * (in_tile + out_tile) + 2 * p_bytes + tmp) * 1.4)
    vmem = max(16 * 1024 * 1024, min(vmem, 64 * 1024 * 1024))  # valid on v7x too

    cost = pl.CostEstimate(
        flops=int(2 * N_pad * K3 * CH * (L_pad // TL)),
        transcendentals=0,
        bytes_accessed=int(2 * N_pad * scale * L_pad * itemsize + p_bytes),
    )

    kernel = functools.partial(_srp_shuffle_relu_kernel, scale=scale, n_split=n_split)

    out2 = pl.pallas_call(
        kernel,
        out_shape=jax.ShapeDtypeStruct((N_pad, L_pad * scale), x.dtype),
        grid=grid,
        in_specs=[in_spec,
                  pl.BlockSpec((K3, CH), lambda r, t: (0, 0))],
        out_specs=pl.BlockSpec((TN, CH), lambda r, t: (r, t)),
        compiler_params=pltpu.CompilerParams(
            dimension_semantics=("parallel", "parallel"),
            vmem_limit_bytes=vmem,
        ),
        cost_estimate=cost,
    )(x_in, p3)

    if N_pad != N or L_pad != L:
        out2 = out2[:N, :out_L]
    return out2.reshape(B, out_C, out_L)  # contiguous (free) view


def _reference(x, scale=SCALE):
    B, C, L = x.shape
    out_C = C // scale
    xv = x.reshape(B, out_C, scale, L)
    xp = jnp.transpose(xv, (0, 1, 3, 2))
    return jnp.maximum(xp.reshape(B, out_C, scale * L), 0.0)


if __name__ == "__main__":
    key = jax.random.PRNGKey(0)
    k1, k2 = jax.random.split(key)

    # Small shape matching the module's (B, C, L) convention (C % scale == 0);
    # exercises the single-tile (pre-flattened 2D) path.
    B, C, L = 2, 40, 16
    x = jax.random.normal(k1, (B, C, L), dtype=jnp.float32)
    out = jax.block_until_ready(srp_upsample_block(x))
    ref = _reference(x)
    assert out.shape == (B, C // SCALE, L * SCALE), out.shape
    assert jnp.allclose(out, ref, atol=1e-5, rtol=1e-5), "mismatch vs reference (small)"

    # Larger shape exercising the tiled (row-tile x 128-wide l-tile) grid path.
    B2, C2, L2 = 4, 80, 256
    x2 = jax.random.normal(k2, (B2, C2, L2), dtype=jnp.float32)
    out2 = jax.block_until_ready(srp_upsample_block(x2))
    ref2 = _reference(x2)
    assert out2.shape == (B2, C2 // SCALE, L2 * SCALE), out2.shape
    assert jnp.allclose(out2, ref2, atol=1e-5, rtol=1e-5), "mismatch vs reference (large)"

    print("KERNEL_OK")
</pallas_src>

<mosaic_0001>
module attributes {stable_mosaic.version = 11 : i64} {
  func.func @_srp_shuffle_relu_kernel(%arg0: i32, %arg1: i32, %arg2: memref<8x160xf32, #tpu.memory_space<vmem>>, %arg3: memref<480x160xbf16, #tpu.memory_space<vmem>>, %arg4: memref<8x160xf32, #tpu.memory_space<vmem>>) attributes {dimension_semantics = [#tpu.dimension_semantics<parallel>, #tpu.dimension_semantics<parallel>], iteration_bounds = array<i64: 1, 1>, scalar_prefetch = 0 : i64, scratch_operands = 0 : i64, tpu.core_type = #tpu.core_type<tc>, window_params = [{transform_indices = @transform_0, window_bounds = array<i64: 8, 160>}, {pipeline_mode = #tpu.pipeline_mode<synchronous>, transform_indices = @transform_1, window_bounds = array<i64: 480, 160>}, {transform_indices = @transform_2, window_bounds = array<i64: 8, 160>}]} {
    %c0 = arith.constant 0 : index
    %c0_0 = arith.constant 0 : index
    %0 = vector.load %arg2[%c0, %c0_0] : memref<8x160xf32, #tpu.memory_space<vmem>>, vector<8x160xf32>
    %1 = arith.truncf %0 : vector<8x160xf32> to vector<8x160xbf16>
    %2 = arith.extf %1 : vector<8x160xbf16> to vector<8x160xf32>
    %3 = arith.subf %0, %2 : vector<8x160xf32>
    %4 = arith.truncf %3 : vector<8x160xf32> to vector<8x160xbf16>
    %5 = arith.extf %4 : vector<8x160xbf16> to vector<8x160xf32>
    %6 = arith.subf %3, %5 : vector<8x160xf32>
    %7 = arith.truncf %6 : vector<8x160xf32> to vector<8x160xbf16>
    %8 = tpu.concatenate %1, %4, %7 in 1 : vector<8x160xbf16>, vector<8x160xbf16>, vector<8x160xbf16> -> vector<8x480xbf16>
    %c0_1 = arith.constant 0 : index
    %c0_2 = arith.constant 0 : index
    %9 = vector.load %arg3[%c0_1, %c0_2] : memref<480x160xbf16, #tpu.memory_space<vmem>>, vector<480x160xbf16>
    %cst = arith.constant dense<0.000000e+00> : vector<8x160xf32>
    %10 = tpu.matmul %8, %9, %cst {dimension_numbers = #tpu.dot_dimension_numbers<[1], [0], [0], [1], [0, 0, 1, 1], [], []>} : vector<8x480xbf16>, vector<480x160xbf16>, vector<8x160xf32> -> vector<8x160xf32>
    %cst_3 = arith.constant 0.000000e+00 : f32
    %11 = vector.broadcast %cst_3 : f32 to vector<8x160xf32>
    %12 = arith.maximumf %10, %11 : vector<8x160xf32>
    %c0_4 = arith.constant 0 : index
    %c0_5 = arith.constant 0 : index
    %13 = vector.load %arg4[%c0_4, %c0_5] : memref<8x160xf32, #tpu.memory_space<vmem>>, vector<8x160xf32>
    tpu.vector_store %arg4[%c0_4, %c0_5], %12 {strides = array<i32>} : memref<8x160xf32, #tpu.memory_space<vmem>>, vector<8x160xf32>,
    return
  }
  func.func @transform_0(%arg0: i32, %arg1: i32) -> (i32, i32) {
    %c0_i32 = arith.constant 0 : i32
    %c0_i32_0 = arith.constant 0 : i32
    return %arg0, %c0_i32 : i32, i32
  }
  func.func @transform_1(%arg0: i32, %arg1: i32) -> (i32, i32) {
    %c0_i32 = arith.constant 0 : i32
    %c0_i32_0 = arith.constant 0 : i32
    %c0_i32_1 = arith.constant 0 : i32
    return %c0_i32, %c0_i32_0 : i32, i32
  }
  func.func @transform_2(%arg0: i32, %arg1: i32) -> (i32, i32) {
    %c0_i32 = arith.constant 0 : i32
    return %arg0, %arg1 : i32, i32
  }
}

</mosaic_0001>

<llo_original>
// kernel: tpu_custom_call.1
$region0: #{tpu_custom_call.1}
  #allocation0 [shape = 'u32[]', space=smem, size = 0x4, offset = 0x4, fixed_abs, tag = 'smem constant byte address 0x4 - core index']
  #allocation1 [shape = 'u32[72,128]{1,0:T(1,128)}', space=vmem, size = 0x9000, scoped, tag = 'internal scratch']
  %s0 = inlined_call_operand.vmem [shape: f32[8,160], index: 0, kind: input, shape index: {}]
  %s1 = inlined_call_operand.vmem [shape: bf16[480,160], index: 1, kind: input, shape index: {}]
  %s2 = inlined_call_operand.hbm [shape: f32[8,160], index: 2, kind: output, shape index: {}]
  %s3 = sld [smem:[#allocation0]]
  $region18: #{tpu_custom_call.1} parent=0
    _
  %s5 = ssub.s32 1, %s3
  %s6 = scalar_select 0, %s5, %s3
  $region1: #{tpu_custom_call.1} parent=0
    #allocation2 [shape = 'u8[8192]{0}', space=vmem, size = 0x2000, scoped, tag = 'output window, operand 0, single buffered']
    #allocation3 [shape = 's32[1]{0}', space=sflag, size = 0x4, scoped, tag = 'scoped memory for tpu_custom_call.1']
    %7 = vsyncpa [#allocation3], 0
    // Predicated region
    $region2: #{tpu_custom_call.1} parent=1 // pred_check
      _
    $region3: #{tpu_custom_call.1} parent=1 // pred_check_branch
      %9 = sbr.rel (0) target = $region5
    $region4: #{tpu_custom_call.1} parent=1 // pred_region
      _
    $region5: #{tpu_custom_call.1} parent=1 // pred_fallthru
      _
    // Predicated region
    $region6: #{tpu_custom_call.1} parent=1 // pred_check
      _
    $region7: #{tpu_custom_call.1} parent=1 // pred_check_branch
      %11 = sbr.rel (0) target = $region9
    $region8: #{tpu_custom_call.1} parent=1 // pred_region
      _
    $region9: #{tpu_custom_call.1} parent=1 // pred_fallthru
      _
    %v13 = vld [vmem:[%s0] sm:$0xff]
    %v14 = vld [vmem:[%s0 + $0x8] sm:$0xff]
    %v15 = vpack.c.bf16 %v14, %v13
    %v16 = vunpack.c.l.bf16 %v15
    %v17 = vunpack.c.h.bf16 %v15
    %v18 = vsub.f32 %v13, %v16
    %v19 = vsub.f32 %v14, %v17
    %v20 = vpack.c.bf16 %v19, %v18
    %v21 = vunpack.c.l.bf16 %v20
    %v22 = vunpack.c.h.bf16 %v20
    %v23 = vsub.f32 %v18, %v21
    %v24 = vsub.f32 %v19, %v22
    %v25 = vpack.c.bf16 %v24, %v23
    %v27 = vunpack.c.l.b16 %v15
    %v28 = vunpack.c.h.b16 %v15
    %v29 = vpack.c.b16 %v27, %v27
    %v30 = vpack.c.b16 %v28, %v28
    %v33 = vunpack.c.l.b16 %v20
    %v34 = vunpack.c.h.b16 %v20
    %v35 = vpack.c.b16 %v33, %v33
    %v36 = vpack.c.b16 %v34, %v34
    %37 = vrot.lane.b32.xlu0 %v35, 32
    %v38 = vpop.permute.xlu0 %37
    %39 = vrot.lane.b32.xlu0 %v36, 32
    %v40 = vpop.permute.xlu0 %39
    %vm41 = vcmask 261120
    %v42 = vsel %vm41, %v38, %v40
    %v44 = vunpack.c.l.b16 %v25
    %v45 = vunpack.c.h.b16 %v25
    %v46 = vpack.c.b16 %v44, %v44
    %v47 = vpack.c.b16 %v45, %v45
    %48 = vrot.lane.b32.xlu0 %v46, 64
    %v49 = vpop.permute.xlu0 %48
    %50 = vrot.lane.b32.xlu0 %v47, 64
    %v51 = vpop.permute.xlu0 %50
    %vm52 = vcmask 523264
    %v53 = vsel %vm52, %v49, %v51
    %vm54 = vcmask 261120
    %v57 = vsel %vm54, %v30, %v38
    %vm59 = vcmask 523264
    %v62 = vsel %vm59, %v42, %v49
    %v64 = vld [vmem:[%s1] sm:$0xff]
    %v65 = vld [vmem:[%s1 + $0x8] sm:$0xff]
    %v66 = vld [vmem:[%s1 + $0x10] sm:$0xff]
    %v67 = vld [vmem:[%s1 + $0x18] sm:$0xff]
    %v68 = vld [vmem:[%s1 + $0x20] sm:$0xff]
    %v69 = vld [vmem:[%s1 + $0x28] sm:$0xff]
    %v70 = vld [vmem:[%s1 + $0x30] sm:$0xff]
    %v71 = vld [vmem:[%s1 + $0x38] sm:$0xff]
    %v72 = vld [vmem:[%s1 + $0x40] sm:$0xff]
    %v73 = vld [vmem:[%s1 + $0x48] sm:$0xff]
    %v74 = vld [vmem:[%s1 + $0x50] sm:$0xff]
    %v75 = vld [vmem:[%s1 + $0x58] sm:$0xff]
    %v76 = vld [vmem:[%s1 + $0x60] sm:$0xff]
    %v77 = vld [vmem:[%s1 + $0x68] sm:$0xff]
    %v78 = vld [vmem:[%s1 + $0x70] sm:$0xff]
    %v79 = vld [vmem:[%s1 + $0x78] sm:$0xff]
    %v80 = vld [vmem:[%s1 + $0x80] sm:$0xff]
    %v81 = vld [vmem:[%s1 + $0x88] sm:$0xff]
    %v82 = vld [vmem:[%s1 + $0x90] sm:$0xff]
    %v83 = vld [vmem:[%s1 + $0x98] sm:$0xff]
    %v84 = vld [vmem:[%s1 + $0xa0] sm:$0xff]
    %v85 = vld [vmem:[%s1 + $0xa8] sm:$0xff]
    %v86 = vld [vmem:[%s1 + $0xb0] sm:$0xff]
    %v87 = vld [vmem:[%s1 + $0xb8] sm:$0xff]
    %v88 = vld [vmem:[%s1 + $0xc0] sm:$0xff]
    %v89 = vld [vmem:[%s1 + $0xc8] sm:$0xff]
    %v90 = vld [vmem:[%s1 + $0xd0] sm:$0xff]
    %v91 = vld [vmem:[%s1 + $0xd8] sm:$0xff]
    %v92 = vld [vmem:[%s1 + $0xe0] sm:$0xff]
    %v93 = vld [vmem:[%s1 + $0xe8] sm:$0xff]
    %v94 = vld [vmem:[%s1 + $0xf0] sm:$0xff]
    %v95 = vld [vmem:[%s1 + $0xf8] sm:$0xff]
    %v96 = vld [vmem:[%s1 + $0x100] sm:$0xff]
    %v97 = vld [vmem:[%s1 + $0x108] sm:$0xff]
    %v98 = vld [vmem:[%s1 + $0x110] sm:$0xff]
    %v99 = vld [vmem:[%s1 + $0x118] sm:$0xff]
    %v100 = vld [vmem:[%s1 + $0x120] sm:$0xff]
    %v101 = vld [vmem:[%s1 + $0x128] sm:$0xff]
    %v102 = vld [vmem:[%s1 + $0x130] sm:$0xff]
    %v103 = vld [vmem:[%s1 + $0x138] sm:$0xff]
    %v104 = vld [vmem:[%s1 + $0x140] sm:$0xff]
    %v105 = vld [vmem:[%s1 + $0x148] sm:$0xff]
    %v106 = vld [vmem:[%s1 + $0x150] sm:$0xff]
    %v107 = vld [vmem:[%s1 + $0x158] sm:$0xff]
    %v108 = vld [vmem:[%s1 + $0x160] sm:$0xff]
    %v109 = vld [vmem:[%s1 + $0x168] sm:$0xff]
    %v110 = vld [vmem:[%s1 + $0x170] sm:$0xff]
    %v111 = vld [vmem:[%s1 + $0x178] sm:$0xff]
    %v112 = vld [vmem:[%s1 + $0x180] sm:$0xff]
    %v113 = vld [vmem:[%s1 + $0x188] sm:$0xff]
    %v114 = vld [vmem:[%s1 + $0x190] sm:$0xff]
    %v115 = vld [vmem:[%s1 + $0x198] sm:$0xff]
    %v116 = vld [vmem:[%s1 + $0x1a0] sm:$0xff]
    %v117 = vld [vmem:[%s1 + $0x1a8] sm:$0xff]
    %v118 = vld [vmem:[%s1 + $0x1b0] sm:$0xff]
    %v119 = vld [vmem:[%s1 + $0x1b8] sm:$0xff]
    %v120 = vld [vmem:[%s1 + $0x1c0] sm:$0xff]
    %v121 = vld [vmem:[%s1 + $0x1c8] sm:$0xff]
    %v122 = vld [vmem:[%s1 + $0x1d0] sm:$0xff]
    %v123 = vld [vmem:[%s1 + $0x1d8] sm:$0xff]
    %v184 = vunpack.c.l.b16 %v64
    %v185 = vunpack.c.h.b16 %v64
    %v186 = vunpack.c.l.b16 %v65
    %v187 = vunpack.c.h.b16 %v65
    %v188 = vunpack.c.l.b16 %v66
    %v189 = vunpack.c.h.b16 %v66
    %v190 = vunpack.c.l.b16 %v67
    %v191 = vunpack.c.h.b16 %v67
    %v192 = vunpack.c.l.b16 %v68
    %v193 = vunpack.c.h.b16 %v68
    %v194 = vunpack.c.l.b16 %v69
    %v195 = vunpack.c.h.b16 %v69
    %v196 = vunpack.c.l.b16 %v70
    %v197 = vunpack.c.h.b16 %v70
    %v198 = vunpack.c.l.b16 %v71
    %v199 = vunpack.c.h.b16 %v71
    %v200 = vunpack.c.l.b16 %v72
    %v201 = vunpack.c.h.b16 %v72
    %v202 = vunpack.c.l.b16 %v73
    %v203 = vunpack.c.h.b16 %v73
    %v204 = vunpack.c.l.b16 %v74
    %v205 = vunpack.c.h.b16 %v74
    %v206 = vunpack.c.l.b16 %v75
    %v207 = vunpack.c.h.b16 %v75
    %v208 = vunpack.c.l.b16 %v76
    %v209 = vunpack.c.h.b16 %v76
    %v210 = vunpack.c.l.b16 %v77
    %v211 = vunpack.c.h.b16 %v77
    %v212 = vunpack.c.l.b16 %v78
    %v213 = vunpack.c.h.b16 %v78
    %v214 = vunpack.c.l.b16 %v79
    %v215 = vunpack.c.h.b16 %v79
    %v216 = vunpack.c.l.b16 %v80
    %v217 = vunpack.c.h.b16 %v80
    %v218 = vunpack.c.l.b16 %v81
    %v219 = vunpack.c.h.b16 %v81
    %v220 = vunpack.c.l.b16 %v82
    %v221 = vunpack.c.h.b16 %v82
    %v222 = vunpack.c.l.b16 %v83
    %v223 = vunpack.c.h.b16 %v83
    %v224 = vunpack.c.l.b16 %v84
    %v225 = vunpack.c.h.b16 %v84
    %v226 = vunpack.c.l.b16 %v85
    %v227 = vunpack.c.h.b16 %v85
    %v228 = vunpack.c.l.b16 %v86
    %v229 = vunpack.c.h.b16 %v86
    %v230 = vunpack.c.l.b16 %v87
    %v231 = vunpack.c.h.b16 %v87
    %v232 = vunpack.c.l.b16 %v88
    %v233 = vunpack.c.h.b16 %v88
    %v234 = vunpack.c.l.b16 %v89
    %v235 = vunpack.c.h.b16 %v89
    %v236 = vunpack.c.l.b16 %v90
    %v237 = vunpack.c.h.b16 %v90
    %v238 = vunpack.c.l.b16 %v91
    %v239 = vunpack.c.h.b16 %v91
    %v240 = vunpack.c.l.b16 %v92
    %v241 = vunpack.c.h.b16 %v92
    %v242 = vunpack.c.l.b16 %v93
    %v243 = vunpack.c.h.b16 %v93
    %v244 = vunpack.c.l.b16 %v94
    %v245 = vunpack.c.h.b16 %v94
    %v246 = vunpack.c.l.b16 %v95
    %v247 = vunpack.c.h.b16 %v95
    %v248 = vunpack.c.l.b16 %v96
    %v249 = vunpack.c.h.b16 %v96
    %v250 = vunpack.c.l.b16 %v97
    %v251 = vunpack.c.h.b16 %v97
    %v252 = vunpack.c.l.b16 %v98
    %v253 = vunpack.c.h.b16 %v98
    %v254 = vunpack.c.l.b16 %v99
    %v255 = vunpack.c.h.b16 %v99
    %v256 = vunpack.c.l.b16 %v100
    %v257 = vunpack.c.h.b16 %v100
    %v258 = vunpack.c.l.b16 %v101
    %v259 = vunpack.c.h.b16 %v101
    %v260 = vunpack.c.l.b16 %v102
    %v261 = vunpack.c.h.b16 %v102
    %v262 = vunpack.c.l.b16 %v103
    %v263 = vunpack.c.h.b16 %v103
    %v264 = vunpack.c.l.b16 %v104
    %v265 = vunpack.c.h.b16 %v104
    %v266 = vunpack.c.l.b16 %v105
    %v267 = vunpack.c.h.b16 %v105
    %v268 = vunpack.c.l.b16 %v106
    %v269 = vunpack.c.h.b16 %v106
    %v270 = vunpack.c.l.b16 %v107
    %v271 = vunpack.c.h.b16 %v107
    %v272 = vunpack.c.l.b16 %v108
    %v273 = vunpack.c.h.b16 %v108
    %v274 = vunpack.c.l.b16 %v109
    %v275 = vunpack.c.h.b16 %v109
    %v276 = vunpack.c.l.b16 %v110
    %v277 = vunpack.c.h.b16 %v110
    %v278 = vunpack.c.l.b16 %v111
    %v279 = vunpack.c.h.b16 %v111
    %v280 = vunpack.c.l.b16 %v112
    %v281 = vunpack.c.h.b16 %v112
    %v282 = vunpack.c.l.b16 %v113
    %v283 = vunpack.c.h.b16 %v113
    %v284 = vunpack.c.l.b16 %v114
    %v285 = vunpack.c.h.b16 %v114
    %v286 = vunpack.c.l.b16 %v115
    %v287 = vunpack.c.h.b16 %v115
    %v288 = vunpack.c.l.b16 %v116
    %v289 = vunpack.c.h.b16 %v116
    %v290 = vunpack.c.l.b16 %v117
    %v291 = vunpack.c.h.b16 %v117
    %v292 = vunpack.c.l.b16 %v118
    %v293 = vunpack.c.h.b16 %v118
    %v294 = vunpack.c.l.b16 %v119
    %v295 = vunpack.c.h.b16 %v119
    %v296 = vunpack.c.l.b16 %v120
    %v297 = vunpack.c.h.b16 %v120
    %v298 = vunpack.c.l.b16 %v121
    %v299 = vunpack.c.h.b16 %v121
    %v300 = vunpack.c.l.b16 %v122
    %v301 = vunpack.c.h.b16 %v122
    %v302 = vunpack.c.l.b16 %v123
    %v303 = vunpack.c.h.b16 %v123
    %v304 = vpack.c.b16 %v186, %v184
    %v305 = vpack.c.b16 %v187, %v185
    %v306 = vpack.c.b16 %v190, %v188
    %v307 = vpack.c.b16 %v191, %v189
    %v308 = vpack.c.b16 %v194, %v192
    %v309 = vpack.c.b16 %v195, %v193
    %v310 = vpack.c.b16 %v198, %v196
    %v311 = vpack.c.b16 %v199, %v197
    %v312 = vpack.c.b16 %v202, %v200
    %v313 = vpack.c.b16 %v203, %v201
    %v314 = vpack.c.b16 %v206, %v204
    %v315 = vpack.c.b16 %v207, %v205
    %v316 = vpack.c.b16 %v210, %v208
    %v317 = vpack.c.b16 %v211, %v209
    %v318 = vpack.c.b16 %v214, %v212
    %v319 = vpack.c.b16 %v215, %v213
    %v320 = vpack.c.b16 %v218, %v216
    %v321 = vpack.c.b16 %v219, %v217
    %v322 = vpack.c.b16 %v222, %v220
    %v323 = vpack.c.b16 %v223, %v221
    %v324 = vpack.c.b16 %v226, %v224
    %v325 = vpack.c.b16 %v227, %v225
    %v326 = vpack.c.b16 %v230, %v228
    %v327 = vpack.c.b16 %v231, %v229
    %v328 = vpack.c.b16 %v234, %v232
    %v329 = vpack.c.b16 %v235, %v233
    %v330 = vpack.c.b16 %v238, %v236
    %v331 = vpack.c.b16 %v239, %v237
    %v332 = vpack.c.b16 %v242, %v240
    %v333 = vpack.c.b16 %v243, %v241
    %v334 = vpack.c.b16 %v246, %v244
    %v335 = vpack.c.b16 %v247, %v245
    %v336 = vpack.c.b16 %v250, %v248
    %v337 = vpack.c.b16 %v251, %v249
    %v338 = vpack.c.b16 %v254, %v252
    %v339 = vpack.c.b16 %v255, %v253
    %v340 = vpack.c.b16 %v258, %v256
    %v341 = vpack.c.b16 %v259, %v257
    %v342 = vpack.c.b16 %v262, %v260
    %v343 = vpack.c.b16 %v263, %v261
    %v344 = vpack.c.b16 %v266, %v264
    %v345 = vpack.c.b16 %v267, %v265
    %v346 = vpack.c.b16 %v270, %v268
    %v347 = vpack.c.b16 %v271, %v269
    %v348 = vpack.c.b16 %v274, %v272
    %v349 = vpack.c.b16 %v275, %v273
    %v350 = vpack.c.b16 %v278, %v276
    %v351 = vpack.c.b16 %v279, %v277
    %v352 = vpack.c.b16 %v282, %v280
    %v353 = vpack.c.b16 %v283, %v281
    %v354 = vpack.c.b16 %v286, %v284
    %v355 = vpack.c.b16 %v287, %v285
    %v356 = vpack.c.b16 %v290, %v288
    %v357 = vpack.c.b16 %v291, %v289
    %v358 = vpack.c.b16 %v294, %v292
    %v359 = vpack.c.b16 %v295, %v293
    %v360 = vpack.c.b16 %v298, %v296
    %v361 = vpack.c.b16 %v299, %v297
    %v362 = vpack.c.b16 %v302, %v300
    %v363 = vpack.c.b16 %v303, %v301
    %vm424 = vcmask 785408
    %v426 = vsel %vm424, %v53, 0
    %428 = vmatpush.bf16.msra.mxu0 %v318
    %429 = vmatpush.bf16.msra.mxu0 %v316
    %430 = vmatpush.bf16.msra.mxu0 %v314
    %431 = vmatpush.bf16.msra.mxu0 %v312
    %432 = vmatpush.bf16.msra.mxu0 %v310
    %433 = vmatpush.bf16.msra.mxu0 %v308
    %434 = vmatpush.bf16.msra.mxu0 %v306
    %435 = vmatpush.bf16.msra.mxu0 %v304
    %436 = vmatmul.bf16.gmra.mxu0 %v29
    %v437 = vpop.f32.mrf.mxu0
    %v438 = vadd.f32 0.0, %v437
    %v439 = vpop.f32.mrf.mxu0
    %440 = vdwg.mxu0
    %441 = vmatpush.bf16.msra.mxu0 %v334
    %442 = vmatpush.bf16.msra.mxu0 %v332
    %443 = vmatpush.bf16.msra.mxu0 %v330
    %444 = vmatpush.bf16.msra.mxu0 %v328
    %445 = vmatpush.bf16.msra.mxu0 %v326
    %446 = vmatpush.bf16.msra.mxu0 %v324
    %447 = vmatpush.bf16.msra.mxu0 %v322
    %448 = vmatpush.bf16.msra.mxu0 %v320
    %449 = vmatmul.bf16.gmra.mxu0 %v57
    %v450 = vpop.f32.mrf.mxu0
    %v451 = vadd.f32 %v438, %v450
    %v452 = vpop.f32.mrf.mxu0
    %453 = vdwg.mxu0
    %454 = vmatpush.bf16.msra.mxu0 %v350
    %455 = vmatpush.bf16.msra.mxu0 %v348
    %456 = vmatpush.bf16.msra.mxu0 %v346
    %457 = vmatpush.bf16.msra.mxu0 %v344
    %458 = vmatpush.bf16.msra.mxu0 %v342
    %459 = vmatpush.bf16.msra.mxu0 %v340
    %460 = vmatpush.bf16.msra.mxu0 %v338
    %461 = vmatpush.bf16.msra.mxu0 %v336
    %462 = vmatmul.bf16.gmra.mxu0 %v62
    %v463 = vpop.f32.mrf.mxu0
    %v464 = vadd.f32 %v451, %v463
    %v465 = vpop.f32.mrf.mxu0
    %466 = vdwg.mxu0
    %467 = vmatpush.bf16.msra.mxu0 0
    %468 = vmatpush.bf16.msra.mxu0 0
    %469 = vmatpush.bf16.msra.mxu0 %v362
    %470 = vmatpush.bf16.msra.mxu0 %v360
    %471 = vmatpush.bf16.msra.mxu0 %v358
    %472 = vmatpush.bf16.msra.mxu0 %v356
    %473 = vmatpush.bf16.msra.mxu0 %v354
    %474 = vmatpush.bf16.msra.mxu0 %v352
    %475 = vmatmul.bf16.gmra.mxu0 %v426
    %v476 = vpop.f32.mrf.mxu0
    %v477 = vadd.f32 %v464, %v476
    %v478 = vpop.f32.mrf.mxu0
    %479 = vdwg.mxu0
    %480 = vmatpush.bf16.msra.mxu0 %v319
    %481 = vmatpush.bf16.msra.mxu0 %v317
    %482 = vmatpush.bf16.msra.mxu0 %v315
    %483 = vmatpush.bf16.msra.mxu0 %v313
    %484 = vmatpush.bf16.msra.mxu0 %v311
    %485 = vmatpush.bf16.msra.mxu0 %v309
    %486 = vmatpush.bf16.msra.mxu0 %v307
    %487 = vmatpush.bf16.msra.mxu0 %v305
    %488 = vmatmul.bf16.gmra.mxu0 %v29
    %v489 = vpop.f32.mrf.mxu0
    %v490 = vadd.f32 0.0, %v489
    %v491 = vpop.f32.mrf.mxu0
    %492 = vdwg.mxu0
    %493 = vmatpush.bf16.msra.mxu0 %v335
    %494 = vmatpush.bf16.msra.mxu0 %v333
    %495 = vmatpush.bf16.msra.mxu0 %v331
    %496 = vmatpush.bf16.msra.mxu0 %v329
    %497 = vmatpush.bf16.msra.mxu0 %v327
    %498 = vmatpush.bf16.msra.mxu0 %v325
    %499 = vmatpush.bf16.msra.mxu0 %v323
    %500 = vmatpush.bf16.msra.mxu0 %v321
    %501 = vmatmul.bf16.gmra.mxu0 %v57
    %v502 = vpop.f32.mrf.mxu0
    %v503 = vadd.f32 %v490, %v502
    %v504 = vpop.f32.mrf.mxu0
    %505 = vdwg.mxu0
    %506 = vmatpush.bf16.msra.mxu0 %v351
    %507 = vmatpush.bf16.msra.mxu0 %v349
    %508 = vmatpush.bf16.msra.mxu0 %v347
    %509 = vmatpush.bf16.msra.mxu0 %v345
    %510 = vmatpush.bf16.msra.mxu0 %v343
    %511 = vmatpush.bf16.msra.mxu0 %v341
    %512 = vmatpush.bf16.msra.mxu0 %v339
    %513 = vmatpush.bf16.msra.mxu0 %v337
    %514 = vmatmul.bf16.gmra.mxu0 %v62
    %v515 = vpop.f32.mrf.mxu0
    %v516 = vadd.f32 %v503, %v515
    %v517 = vpop.f32.mrf.mxu0
    %518 = vdwg.mxu0
    %519 = vmatpush.bf16.msra.mxu0 0
    %520 = vmatpush.bf16.msra.mxu0 0
    %521 = vmatpush.bf16.msra.mxu0 %v363
    %522 = vmatpush.bf16.msra.mxu0 %v361
    %523 = vmatpush.bf16.msra.mxu0 %v359
    %524 = vmatpush.bf16.msra.mxu0 %v357
    %525 = vmatpush.bf16.msra.mxu0 %v355
    %526 = vmatpush.bf16.msra.mxu0 %v353
    %527 = vmatmul.bf16.gmra.mxu0 %v426
    %v528 = vpop.f32.mrf.mxu0
    %v529 = vadd.f32 %v516, %v528
    %v530 = vpop.f32.mrf.mxu0
    %531 = vdwg.mxu0
    %v532 = vmax.f32 %v477, 0.0
    %v533 = vmax.f32 %v529, 0.0
    %534 = vst [vmem:[#allocation2] sm:$0xff] %v532
    %535 = vst.msk [vmem:[#allocation2 + $0x8] sm:$0xff] %vm54, %v533
    // Predicated region
    $region10: #{tpu_custom_call.1} parent=1 // pred_check
      _
    $region11: #{tpu_custom_call.1} parent=1 // pred_check_branch
      %537 = sbr.rel (0) target = $region13
    $region12: #{tpu_custom_call.1} parent=1 // pred_region
      %539 = vsyncadd [#allocation3], 0
      %s541 = sshll.u32 [#allocation2], 4
      %s542 = int_to_ptr.vmem [resolvable:$true] %s541
      %s543 = sshll.u32 %s2, 4
      %s544 = int_to_ptr.hbm [resolvable:$true] %s543
      %546 = dma.vmem_to_hbm [thread:$0]  %s542, 256, %s544, [#allocation3]
    $region13: #{tpu_custom_call.1} parent=1 // pred_fallthru
      _
    // Predicated region
    $region14: #{tpu_custom_call.1} parent=1 // pred_check
      _
    $region15: #{tpu_custom_call.1} parent=1 // pred_check_branch
      %548 = sbr.rel (0) target = $region17
    $region16: #{tpu_custom_call.1} parent=1 // pred_region
      %550 = dma.done [#allocation3], 256
    $region17: #{tpu_custom_call.1} parent=1 // pred_fallthru
      _
    %551 = vsyncpa [#allocation3], 1

</llo_original>
